<compile_context>
chip_gen: v5e
topology: v5e:2x2
jax: 0.10.0
libtpu: 0.0.40
codegen_flags: <defaults>
</compile_context>

<pallas_src>
import functools

import jax
import jax.numpy as jnp
from jax.experimental import pallas as pl
from jax.experimental.pallas import tpu as pltpu

EPS = 1e-5
LANE = 128


def _round_up(n, m):
    return ((n + m - 1) // m) * m


# ---------------------------------------------------------------------------
# Pass 1: per-feature sum and sum-of-squares over the batch (single pass over
# x, two sublane reductions on the same load).  Zero-padded batch rows / obs
# columns add nothing to either accumulator, so dividing by the *true* B
# afterwards gives exact batch statistics for the real features.
# ---------------------------------------------------------------------------
def _stats_kernel(x_ref, sum_ref, sq_ref):
    @pl.when(pl.program_id(0) == 0)
    def _():
        sum_ref[...] = jnp.zeros_like(sum_ref)
        sq_ref[...] = jnp.zeros_like(sq_ref)

    x = x_ref[...].astype(jnp.float32)
    sum_ref[...] += jnp.sum(x, axis=0, keepdims=True)
    sq_ref[...] += jnp.sum(x * x, axis=0, keepdims=True)


def _batch_stats(x_pad, obs_p, tb):
    nb = x_pad.shape[0] // tb
    return pl.pallas_call(
        _stats_kernel,
        out_shape=(jax.ShapeDtypeStruct((1, obs_p), jnp.float32),
                   jax.ShapeDtypeStruct((1, obs_p), jnp.float32)),
        grid_spec=pltpu.PrefetchScalarGridSpec(
            num_scalar_prefetch=0,
            grid=(nb,),
            in_specs=[pl.BlockSpec((tb, obs_p), lambda i: (i, 0))],
            out_specs=(pl.BlockSpec((1, obs_p), lambda i: (0, 0)),
                       pl.BlockSpec((1, obs_p), lambda i: (0, 0))),
        ),
        compiler_params=pltpu.CompilerParams(
            dimension_semantics=("arbitrary",)),
    )(x_pad)


# ---------------------------------------------------------------------------
# Pass 2: (BN-folded) Linear -> ReLU -> Linear -> ReLU -> Linear, tiled over B.
# All feature dims are already padded to multiples of 128 in the wrapper.
# ---------------------------------------------------------------------------
def _mlp_kernel(x_ref, w0_ref, b0_ref, w1_ref, b1_ref, w2_ref, b2_ref, o_ref):
    x = x_ref[...].astype(jnp.float32)
    h = jnp.dot(x, w0_ref[...], preferred_element_type=jnp.float32)
    h = jnp.maximum(h + b0_ref[...], 0.0)          # dropout p=0 -> identity
    h = jnp.dot(h, w1_ref[...], preferred_element_type=jnp.float32)
    h = jnp.maximum(h + b1_ref[...], 0.0)
    out = jnp.dot(h, w2_ref[...], preferred_element_type=jnp.float32)
    o_ref[...] = (out + b2_ref[...]).astype(o_ref.dtype)


def policy_forward(x, params, *, tb=256):
    """x: (B, obs_dim) float32.  params: dict of weights.  Returns (B, act_dim)."""
    B, obs_dim = x.shape
    h1 = params["w0"].shape[1]
    h2 = params["w1"].shape[1]
    act_dim = params["w2"].shape[1]

    OBS = _round_up(obs_dim, LANE)
    H1 = _round_up(h1, LANE)
    H2 = _round_up(h2, LANE)
    A = _round_up(act_dim, LANE)

    # batch tile: multiple of 8, no bigger than the (padded) batch
    tb = max(8, min(tb, _round_up(B, 8)))
    bp = _round_up(B, tb)

    x_pad = x.astype(jnp.float32)
    if bp != B or OBS != obs_dim:
        x_pad = jnp.pad(x_pad, ((0, bp - B), (0, OBS - obs_dim)))

    # ---- pass 1: batch statistics over the FULL batch ----
    s, sq = _batch_stats(x_pad, OBS, tb)
    mean = s / B
    var = sq / B - mean * mean                       # biased var (training-mode BN)
    gamma = jnp.zeros((1, OBS), jnp.float32).at[:, :obs_dim].set(params["gamma"])
    beta = jnp.zeros((1, OBS), jnp.float32).at[:, :obs_dim].set(params["beta"])
    scale = gamma * jax.lax.rsqrt(var + EPS)             # (1, OBS); 0 on padded cols
    shift = beta - mean * scale                          # (1, OBS); 0 on padded cols

    # ---- fold BatchNorm into the first linear layer (tiny weight rewrite) ----
    w0_raw = jnp.zeros((OBS, H1), jnp.float32).at[:obs_dim, :h1].set(params["w0"])
    w0_eff = w0_raw * scale.reshape(OBS, 1)              # (OBS, H1)
    b0_eff = (jnp.zeros((1, H1), jnp.float32).at[:, :h1].set(params["b0"])
              + shift @ w0_raw)                          # (1, H1)

    # ---- zero-pad remaining feature dims to multiples of 128 (lane-dense) ----
    w1p = jnp.zeros((H1, H2), jnp.float32).at[:h1, :h2].set(params["w1"])
    b1p = jnp.zeros((1, H2), jnp.float32).at[:, :h2].set(params["b1"])
    w2p = jnp.zeros((H2, A), jnp.float32).at[:h2, :act_dim].set(params["w2"])
    b2p = jnp.zeros((1, A), jnp.float32).at[:, :act_dim].set(params["b2"])

    nb = bp // tb
    out_pad = pl.pallas_call(
        _mlp_kernel,
        out_shape=jax.ShapeDtypeStruct((bp, A), jnp.float32),
        grid_spec=pltpu.PrefetchScalarGridSpec(
            num_scalar_prefetch=0,
            grid=(nb,),
            in_specs=[
                pl.BlockSpec((tb, OBS), lambda i: (i, 0)),     # x tile
                pl.BlockSpec((OBS, H1), lambda i: (0, 0)),     # w0 (BN folded)
                pl.BlockSpec((1, H1), lambda i: (0, 0)),       # b0
                pl.BlockSpec((H1, H2), lambda i: (0, 0)),      # w1
                pl.BlockSpec((1, H2), lambda i: (0, 0)),       # b1
                pl.BlockSpec((H2, A), lambda i: (0, 0)),       # w2
                pl.BlockSpec((1, A), lambda i: (0, 0)),        # b2
            ],
            out_specs=pl.BlockSpec((tb, A), lambda i: (i, 0)),
        ),
        compiler_params=pltpu.CompilerParams(
            dimension_semantics=("parallel",)),                # shards B over TCs (v7x)
    )(x_pad, w0_eff, b0_eff, w1p, b1p, w2p, b2p)

    return out_pad[:B, :act_dim]


def init_params(key, obs_dim, act_dim, hidden_sizes=(64, 64)):
    """Deterministic parameter init mimicking PyTorch nn.Linear defaults."""
    sizes = (obs_dim,) + tuple(hidden_sizes) + (act_dim,)
    params = {
        "gamma": jnp.ones((1, obs_dim), jnp.float32),   # BatchNorm1d weight
        "beta": jnp.zeros((1, obs_dim), jnp.float32),   # BatchNorm1d bias
    }
    for i in range(len(sizes) - 1):
        fan_in, fan_out = sizes[i], sizes[i + 1]
        key, kw, kb = jax.random.split(key, 3)
        bound = 1.0 / jnp.sqrt(fan_in)
        # stored as (in, out) so the kernel does x @ W
        params[f"w{i}"] = jax.random.uniform(
            kw, (fan_in, fan_out), jnp.float32, -bound, bound)
        params[f"b{i}"] = jax.random.uniform(
            kb, (1, fan_out), jnp.float32, -bound, bound)
    return params


def _reference(x, p):
    """Plain-JAX reference of the same forward pass (for sanity checking)."""
    mean = jnp.mean(x, axis=0, keepdims=True)
    var = jnp.mean((x - mean) ** 2, axis=0, keepdims=True)
    h = (x - mean) / jnp.sqrt(var + EPS) * p["gamma"] + p["beta"]
    h = jnp.maximum(h @ p["w0"] + p["b0"], 0.0)
    h = jnp.maximum(h @ p["w1"] + p["b1"], 0.0)
    return h @ p["w2"] + p["b2"]


# TODO(synk): BatchNorm1d's running-stats buffer update (a training-time side
# effect) is not modeled; only the forward output is reproduced.

if __name__ == "__main__":
    key = jax.random.PRNGKey(0)
    B, obs_dim, act_dim = 16, 32, 16
    hidden_sizes = (64, 64)

    kx, kp = jax.random.split(key)
    x = jax.random.normal(kx, (B, obs_dim), jnp.float32)
    params = init_params(kp, obs_dim, act_dim, hidden_sizes)

    # small batch tile (8) so the demo actually exercises the B grid axis
    fwd = jax.jit(functools.partial(policy_forward, tb=8))
    out = jax.block_until_ready(fwd(x, params))

    ref = _reference(x, params)
    assert out.shape == (B, act_dim)
    assert jnp.allclose(out, ref, atol=1e-4, rtol=1e-4)

    print("KERNEL_OK")
</pallas_src>

<mosaic_0001>
module attributes {stable_mosaic.version = 11 : i64} {
  func.func @_stats_kernel(%arg0: i32, %arg1: memref<8x128xf32, #tpu.memory_space<vmem>>, %arg2: memref<1x128xf32, #tpu.memory_space<vmem>>, %arg3: memref<1x128xf32, #tpu.memory_space<vmem>>) attributes {dimension_semantics = [#tpu.dimension_semantics<arbitrary>], iteration_bounds = array<i64: 2>, scalar_prefetch = 0 : i64, scratch_operands = 0 : i64, tpu.core_type = #tpu.core_type<tc>, window_params = [{transform_indices = @transform_0, window_bounds = array<i64: 8, 128>}, {pipeline_mode = #tpu.pipeline_mode<synchronous>, transform_indices = @transform_1, window_bounds = array<i64: 1, 128>}, {pipeline_mode = #tpu.pipeline_mode<synchronous>, transform_indices = @transform_2, window_bounds = array<i64: 1, 128>}]} {
    %c0_i32 = arith.constant 0 : i32
    %0 = arith.cmpi eq, %arg0, %c0_i32 : i32
    %1 = arith.extui %0 : i1 to i32
    %c0_i32_0 = arith.constant 0 : i32
    %2 = arith.cmpi ne, %1, %c0_i32_0 : i32
    scf.if %2 {
      %cst_11 = arith.constant 0.000000e+00 : f32
      %15 = vector.broadcast %cst_11 : f32 to vector<1x128xf32>
      %c0_12 = arith.constant 0 : index
      %c0_13 = arith.constant 0 : index
      %16 = vector.load %arg2[%c0_12, %c0_13] : memref<1x128xf32, #tpu.memory_space<vmem>>, vector<1x128xf32>
      tpu.vector_store %arg2[%c0_12, %c0_13], %15 {strides = array<i32>} : memref<1x128xf32, #tpu.memory_space<vmem>>, vector<1x128xf32>,
      %cst_14 = arith.constant 0.000000e+00 : f32
      %17 = vector.broadcast %cst_14 : f32 to vector<1x128xf32>
      %c0_15 = arith.constant 0 : index
      %c0_16 = arith.constant 0 : index
      %18 = vector.load %arg3[%c0_15, %c0_16] : memref<1x128xf32, #tpu.memory_space<vmem>>, vector<1x128xf32>
      tpu.vector_store %arg3[%c0_15, %c0_16], %17 {strides = array<i32>} : memref<1x128xf32, #tpu.memory_space<vmem>>, vector<1x128xf32>,
    } else {
    }
    %c0 = arith.constant 0 : index
    %c0_1 = arith.constant 0 : index
    %3 = vector.load %arg1[%c0, %c0_1] : memref<8x128xf32, #tpu.memory_space<vmem>>, vector<8x128xf32>
    %c0_2 = arith.constant 0 : index
    %c0_3 = arith.constant 0 : index
    %4 = vector.load %arg2[%c0_2, %c0_3] : memref<1x128xf32, #tpu.memory_space<vmem>>, vector<1x128xf32>
    %cst = arith.constant dense<0.000000e+00> : vector<128xf32>
    %5 = vector.multi_reduction <add>, %3, %cst [0] : vector<8x128xf32> to vector<128xf32>
    %6 = vector.shape_cast %5 : vector<128xf32> to vector<1x128xf32>
    %7 = arith.addf %4, %6 : vector<1x128xf32>
    %c0_4 = arith.constant 0 : index
    %c0_5 = arith.constant 0 : index
    %8 = vector.load %arg2[%c0_4, %c0_5] : memref<1x128xf32, #tpu.memory_space<vmem>>, vector<1x128xf32>
    tpu.vector_store %arg2[%c0_4, %c0_5], %7 {strides = array<i32>} : memref<1x128xf32, #tpu.memory_space<vmem>>, vector<1x128xf32>,
    %c0_6 = arith.constant 0 : index
    %c0_7 = arith.constant 0 : index
    %9 = vector.load %arg3[%c0_6, %c0_7] : memref<1x128xf32, #tpu.memory_space<vmem>>, vector<1x128xf32>
    %10 = arith.mulf %3, %3 : vector<8x128xf32>
    %cst_8 = arith.constant dense<0.000000e+00> : vector<128xf32>
    %11 = vector.multi_reduction <add>, %10, %cst_8 [0] : vector<8x128xf32> to vector<128xf32>
    %12 = vector.shape_cast %11 : vector<128xf32> to vector<1x128xf32>
    %13 = arith.addf %9, %12 : vector<1x128xf32>
    %c0_9 = arith.constant 0 : index
    %c0_10 = arith.constant 0 : index
    %14 = vector.load %arg3[%c0_9, %c0_10] : memref<1x128xf32, #tpu.memory_space<vmem>>, vector<1x128xf32>
    tpu.vector_store %arg3[%c0_9, %c0_10], %13 {strides = array<i32>} : memref<1x128xf32, #tpu.memory_space<vmem>>, vector<1x128xf32>,
    return
  }
  func.func @transform_0(%arg0: i32) -> (i32, i32) {
    %c0_i32 = arith.constant 0 : i32
    %c0_i32_0 = arith.constant 0 : i32
    return %arg0, %c0_i32 : i32, i32
  }
  func.func @transform_1(%arg0: i32) -> (i32, i32) {
    %c0_i32 = arith.constant 0 : i32
    %c0_i32_0 = arith.constant 0 : i32
    %c0_i32_1 = arith.constant 0 : i32
    return %c0_i32, %c0_i32_0 : i32, i32
  }
  func.func @transform_2(%arg0: i32) -> (i32, i32) {
    %c0_i32 = arith.constant 0 : i32
    %c0_i32_0 = arith.constant 0 : i32
    %c0_i32_1 = arith.constant 0 : i32
    return %c0_i32, %c0_i32_0 : i32, i32
  }
}

module attributes {stable_mosaic.version = 11 : i64} {
  func.func @_mlp_kernel(%arg0: i32, %arg1: memref<8x128xf32, #tpu.memory_space<vmem>>, %arg2: memref<128x128xf32, #tpu.memory_space<vmem>>, %arg3: memref<1x128xf32, #tpu.memory_space<vmem>>, %arg4: memref<128x128xf32, #tpu.memory_space<vmem>>, %arg5: memref<1x128xf32, #tpu.memory_space<vmem>>, %arg6: memref<128x128xf32, #tpu.memory_space<vmem>>, %arg7: memref<1x128xf32, #tpu.memory_space<vmem>>, %arg8: memref<8x128xf32, #tpu.memory_space<vmem>>) attributes {dimension_semantics = [#tpu.dimension_semantics<parallel>], iteration_bounds = array<i64: 2>, scalar_prefetch = 0 : i64, scratch_operands = 0 : i64, tpu.core_type = #tpu.core_type<tc>, window_params = [{transform_indices = @transform_0, window_bounds = array<i64: 8, 128>}, {pipeline_mode = #tpu.pipeline_mode<synchronous>, transform_indices = @transform_1, window_bounds = array<i64: 128, 128>}, {pipeline_mode = #tpu.pipeline_mode<synchronous>, transform_indices = @transform_2, window_bounds = array<i64: 1, 128>}, {pipeline_mode = #tpu.pipeline_mode<synchronous>, transform_indices = @transform_3, window_bounds = array<i64: 128, 128>}, {pipeline_mode = #tpu.pipeline_mode<synchronous>, transform_indices = @transform_4, window_bounds = array<i64: 1, 128>}, {pipeline_mode = #tpu.pipeline_mode<synchronous>, transform_indices = @transform_5, window_bounds = array<i64: 128, 128>}, {pipeline_mode = #tpu.pipeline_mode<synchronous>, transform_indices = @transform_6, window_bounds = array<i64: 1, 128>}, {transform_indices = @transform_7, window_bounds = array<i64: 8, 128>}]} {
    %c0 = arith.constant 0 : index
    %c0_0 = arith.constant 0 : index
    %0 = vector.load %arg1[%c0, %c0_0] : memref<8x128xf32, #tpu.memory_space<vmem>>, vector<8x128xf32>
    %c0_1 = arith.constant 0 : index
    %c0_2 = arith.constant 0 : index
    %1 = vector.load %arg2[%c0_1, %c0_2] : memref<128x128xf32, #tpu.memory_space<vmem>>, vector<128x128xf32>
    %cst = arith.constant dense<0.000000e+00> : vector<8x128xf32>
    %2 = tpu.matmul %0, %1, %cst {dimension_numbers = #tpu.dot_dimension_numbers<[1], [0], [0], [1], [0, 0, 1, 1], [], []>} : vector<8x128xf32>, vector<128x128xf32>, vector<8x128xf32> -> vector<8x128xf32>
    %c0_3 = arith.constant 0 : index
    %c0_4 = arith.constant 0 : index
    %3 = vector.load %arg3[%c0_3, %c0_4] : memref<1x128xf32, #tpu.memory_space<vmem>>, vector<1x128xf32>
    %4 = vector.broadcast %3 : vector<1x128xf32> to vector<8x128xf32>
    %5 = arith.addf %2, %4 : vector<8x128xf32>
    %cst_5 = arith.constant 0.000000e+00 : f32
    %6 = vector.broadcast %cst_5 : f32 to vector<8x128xf32>
    %7 = arith.maximumf %5, %6 : vector<8x128xf32>
    %c0_6 = arith.constant 0 : index
    %c0_7 = arith.constant 0 : index
    %8 = vector.load %arg4[%c0_6, %c0_7] : memref<128x128xf32, #tpu.memory_space<vmem>>, vector<128x128xf32>
    %cst_8 = arith.constant dense<0.000000e+00> : vector<8x128xf32>
    %9 = tpu.matmul %7, %8, %cst_8 {dimension_numbers = #tpu.dot_dimension_numbers<[1], [0], [0], [1], [0, 0, 1, 1], [], []>} : vector<8x128xf32>, vector<128x128xf32>, vector<8x128xf32> -> vector<8x128xf32>
    %c0_9 = arith.constant 0 : index
    %c0_10 = arith.constant 0 : index
    %10 = vector.load %arg5[%c0_9, %c0_10] : memref<1x128xf32, #tpu.memory_space<vmem>>, vector<1x128xf32>
    %11 = vector.broadcast %10 : vector<1x128xf32> to vector<8x128xf32>
    %12 = arith.addf %9, %11 : vector<8x128xf32>
    %cst_11 = arith.constant 0.000000e+00 : f32
    %13 = vector.broadcast %cst_11 : f32 to vector<8x128xf32>
    %14 = arith.maximumf %12, %13 : vector<8x128xf32>
    %c0_12 = arith.constant 0 : index
    %c0_13 = arith.constant 0 : index
    %15 = vector.load %arg6[%c0_12, %c0_13] : memref<128x128xf32, #tpu.memory_space<vmem>>, vector<128x128xf32>
    %cst_14 = arith.constant dense<0.000000e+00> : vector<8x128xf32>
    %16 = tpu.matmul %14, %15, %cst_14 {dimension_numbers = #tpu.dot_dimension_numbers<[1], [0], [0], [1], [0, 0, 1, 1], [], []>} : vector<8x128xf32>, vector<128x128xf32>, vector<8x128xf32> -> vector<8x128xf32>
    %c0_15 = arith.constant 0 : index
    %c0_16 = arith.constant 0 : index
    %17 = vector.load %arg7[%c0_15, %c0_16] : memref<1x128xf32, #tpu.memory_space<vmem>>, vector<1x128xf32>
    %18 = vector.broadcast %17 : vector<1x128xf32> to vector<8x128xf32>
    %19 = arith.addf %16, %18 : vector<8x128xf32>
    %c0_17 = arith.constant 0 : index
    %c0_18 = arith.constant 0 : index
    %20 = vector.load %arg8[%c0_17, %c0_18] : memref<8x128xf32, #tpu.memory_space<vmem>>, vector<8x128xf32>
    tpu.vector_store %arg8[%c0_17, %c0_18], %19 {strides = array<i32>} : memref<8x128xf32, #tpu.memory_space<vmem>>, vector<8x128xf32>,
    return
  }
  func.func @transform_0(%arg0: i32) -> (i32, i32) {
    %c0_i32 = arith.constant 0 : i32
    %c0_i32_0 = arith.constant 0 : i32
    return %arg0, %c0_i32 : i32, i32
  }
  func.func @transform_1(%arg0: i32) -> (i32, i32) {
    %c0_i32 = arith.constant 0 : i32
    %c0_i32_0 = arith.constant 0 : i32
    %c0_i32_1 = arith.constant 0 : i32
    return %c0_i32, %c0_i32_0 : i32, i32
  }
  func.func @transform_2(%arg0: i32) -> (i32, i32) {
    %c0_i32 = arith.constant 0 : i32
    %c0_i32_0 = arith.constant 0 : i32
    %c0_i32_1 = arith.constant 0 : i32
    return %c0_i32, %c0_i32_0 : i32, i32
  }
  func.func @transform_3(%arg0: i32) -> (i32, i32) {
    %c0_i32 = arith.constant 0 : i32
    %c0_i32_0 = arith.constant 0 : i32
    %c0_i32_1 = arith.constant 0 : i32
    return %c0_i32, %c0_i32_0 : i32, i32
  }
  func.func @transform_4(%arg0: i32) -> (i32, i32) {
    %c0_i32 = arith.constant 0 : i32
    %c0_i32_0 = arith.constant 0 : i32
    %c0_i32_1 = arith.constant 0 : i32
    return %c0_i32, %c0_i32_0 : i32, i32
  }
  func.func @transform_5(%arg0: i32) -> (i32, i32) {
    %c0_i32 = arith.constant 0 : i32
    %c0_i32_0 = arith.constant 0 : i32
    %c0_i32_1 = arith.constant 0 : i32
    return %c0_i32, %c0_i32_0 : i32, i32
  }
  func.func @transform_6(%arg0: i32) -> (i32, i32) {
    %c0_i32 = arith.constant 0 : i32
    %c0_i32_0 = arith.constant 0 : i32
    %c0_i32_1 = arith.constant 0 : i32
    return %c0_i32, %c0_i32_0 : i32, i32
  }
  func.func @transform_7(%arg0: i32) -> (i32, i32) {
    %c0_i32 = arith.constant 0 : i32
    %c0_i32_0 = arith.constant 0 : i32
    return %arg0, %c0_i32 : i32, i32
  }
}

</mosaic_0001>

<llo_original>
// kernel: policy_forward.2
$region0: #{policy_forward.2}
  #allocation0 [shape = 'u32[]', space=smem, size = 0x4, offset = 0x4, fixed_abs, tag = 'smem constant byte address 0x4 - core index']
  #allocation1 [shape = 'u32[72,128]{1,0:T(1,128)}', space=vmem, size = 0x9000, scoped, tag = 'internal scratch']
  %s0 = inlined_call_operand.vmem [shape: f32[16,128], index: 0, kind: input, shape index: {}]
  %s1 = inlined_call_operand.vmem [shape: f32[1,128], index: 1, kind: output, shape index: {0}]
  %s2 = inlined_call_operand.vmem [shape: f32[1,128], index: 2, kind: output, shape index: {1}]
  %3 = xla_tuple %s1, %s2
  %s4 = sld [smem:[#allocation0]]
  $region49: #{policy_forward.2} parent=0
    _
  %s6 = ssub.s32 1, %s4
  %s7 = scalar_select 0, %s6, %s4
  loop: start=0, step=1, limit=4
  $region2: #{policy_forward.2} parent=0 // loop_pre_header
    _
  $region3: #{policy_forward.2} parent=0 // loop_header
    %s9 = sphi 0, %s13
    %p10 = scmp.ge.s32.totalorder %s9, 4
    %s19 = sphi 0, %s21
    %s22 = sphi 0, %s19
    %s23 = sphi 0, %s22
    %s39 = sphi 0, %s23
    %s43 = sphi 0, %s43
    %s45 = sphi 0, %s43
    %s46 = sphi 0, %s45
    %s60 = sphi 0, %s46
    %s64 = sphi 0, %s64
    %s66 = sphi 0, %s64
    %s67 = sphi 0, %s66
    %s81 = sphi 0, %s67
  $region4: #{policy_forward.2} parent=0 // loop_header_branch
    %12 = sbr.rel (%p10) target = $region8
  $region5: #{policy_forward.2} parent=0 // loop_body
    %s14 = ssub.s32 %s9, 1
    %s15 = ssub.s32 %s9, 2
    %s16 = sadd.s32 %s9, 1
    %s17 = ssub.s32 %s9, %s16
    %p18 = scmp.eq.s32.totalorder %s17, 0
    %s20 = sadd.s32 %s19, 1
    %s21 = scalar_select %p18, %s19, %s20
    %p24 = pneg %p18
    %p25 = scmp.eq.s32.totalorder %s9, 1
    %p26 = por %p24, %p25
    %p27 = scmp.ne.s32.totalorder %s19, %s22
    %p28 = scmp.eq.s32.totalorder %s9, 0
    %p29 = por %p27, %p28
    %p30 = scmp.ne.s32.totalorder %s19, %s22
    %p31 = scmp.eq.s32.totalorder %s14, 1
    %p32 = por %p30, %p31
    %p33 = scmp.ne.s32.totalorder %s22, %s23
    %p34 = scmp.eq.s32.totalorder %s14, 0
    %p35 = por %p33, %p34
    %p36 = scmp.ne.s32.totalorder %s22, %s23
    %p37 = scmp.eq.s32.totalorder %s15, 1
    %p38 = por %p36, %p37
    %p40 = scmp.ne.s32.totalorder %s23, %s39
    %p41 = scmp.eq.s32.totalorder %s15, 0
    %p42 = por %p40, %p41
    %s44 = sadd.s32 %s43, 1
    %p47 = scmp.eq.s32.totalorder %s9, 1
    %p48 = scmp.ne.s32.totalorder %s43, %s45
    %p49 = scmp.eq.s32.totalorder %s9, 0
    %p50 = por %p48, %p49
    %p51 = scmp.ne.s32.totalorder %s43, %s45
    %p52 = scmp.eq.s32.totalorder %s14, 1
    %p53 = por %p51, %p52
    %p54 = scmp.ne.s32.totalorder %s45, %s46
    %p55 = scmp.eq.s32.totalorder %s14, 0
    %p56 = por %p54, %p55
    %p57 = scmp.ne.s32.totalorder %s45, %s46
    %p58 = scmp.eq.s32.totalorder %s15, 1
    %p59 = por %p57, %p58
    %p61 = scmp.ne.s32.totalorder %s46, %s60
    %p62 = scmp.eq.s32.totalorder %s15, 0
    %p63 = por %p61, %p62
    %s65 = sadd.s32 %s64, 1
    %p68 = scmp.eq.s32.totalorder %s9, 1
    %p69 = scmp.ne.s32.totalorder %s64, %s66
    %p70 = scmp.eq.s32.totalorder %s9, 0
    %p71 = por %p69, %p70
    %p72 = scmp.ne.s32.totalorder %s64, %s66
    %p73 = scmp.eq.s32.totalorder %s14, 1
    %p74 = por %p72, %p73
    %p75 = scmp.ne.s32.totalorder %s66, %s67
    %p76 = scmp.eq.s32.totalorder %s14, 0
    %p77 = por %p75, %p76
    %p78 = scmp.ne.s32.totalorder %s66, %s67
    %p79 = scmp.eq.s32.totalorder %s15, 1
    %p80 = por %p78, %p79
    %p82 = scmp.ne.s32.totalorder %s67, %s81
    %p83 = scmp.eq.s32.totalorder %s15, 0
    %p84 = por %p82, %p83
    %p85 = scmp.le.s32.totalorder 1, %s9
    %p86 = scmp.lt.s32.totalorder %s9, 3
    %p87 = pnand %p85, %p86
    %p88 = pneg %p87
    // Predicated region
    $region9: #{policy_forward.2} parent=5 // pred_check
      _
    $region10: #{policy_forward.2} parent=5 // pred_check_branch
      %90 = sbr.rel (%p87) target = $region12
    $region11: #{policy_forward.2} parent=5 // pred_region
      %s91 = ssub.s32 %s9, 1
    $region12: #{policy_forward.2} parent=5 // pred_fallthru
      _
    %p92 = scmp.lt.s32.totalorder %s9, 2
    // Predicated region
    $region13: #{policy_forward.2} parent=5 // pred_check
      %p93 = pneg %p92
    $region14: #{policy_forward.2} parent=5 // pred_check_branch
      %95 = sbr.rel (%p93) target = $region16
    $region15: #{policy_forward.2} parent=5 // pred_region
      // Predicated region
      $region17: #{policy_forward.2} parent=15 // pred_check
        %p96 = pneg %p29
      $region18: #{policy_forward.2} parent=15 // pred_check_branch
        %98 = sbr.rel (%p96) target = $region20
      $region19: #{policy_forward.2} parent=15 // pred_region
        %p99 = scmp.lt.s32.totalorder %s9, 1
        %s100 = scalar_select %p99, %s9, 1
        %s101 = smul.addr %s100, 8
        %s102 = scalar_lea.vmem %s0, %s101
      $region20: #{policy_forward.2} parent=15 // pred_fallthru
        _
    $region16: #{policy_forward.2} parent=5 // pred_fallthru
      _
    %p103 = scmp.le.s32.totalorder 1, %s9
    %p104 = scmp.lt.s32.totalorder %s9, 3
    %p105 = pnand %p103, %p104
    %p106 = pneg %p105
    // Predicated region
    $region21: #{policy_forward.2} parent=5 // pred_check
      _
    $region22: #{policy_forward.2} parent=5 // pred_check_branch
      %108 = sbr.rel (%p105) target = $region24
    $region23: #{policy_forward.2} parent=5 // pred_region
      %s109 = ssub.s32 %s9, 1
      %p110 = scmp.lt.s32.totalorder %s14, 1
      %s111 = scalar_select %p110, %s14, 1
      %s112 = smul.addr %s111, 8
      %s113 = scalar_lea.vmem %s0, %s112
      %p114 = pneg %p35
      %p115 = pneg %p32
      %p116 = pneg %p56
      %p117 = pneg %p53
      %p118 = pneg %p77
      %p119 = pneg %p74
      %p120 = scmp.lt.s32.totalorder %s14, 1
      %s121 = scalar_select %p120, %s14, 1
      %s122 = smul.addr %s121, 8
      %s123 = scalar_lea.vmem %s0, %s122
      %p124 = scmp.eq.s32.totalorder %s14, 0
      // Predicated region
      $region25: #{policy_forward.2} parent=23 // pred_check
        %p125 = pneg %p124
      $region26: #{policy_forward.2} parent=23 // pred_check_branch
        %127 = sbr.rel (%p125) target = $region28
      $region27: #{policy_forward.2} parent=23 // pred_region
        %128 = vst [vmem:[%s1] sm:$0x1] 0.0
        %129 = vst [vmem:[%s2] sm:$0x1] 0.0
      $region28: #{policy_forward.2} parent=23 // pred_fallthru
        _
      %v130 = vld [vmem:[%s123] sm:$0xff]
      %v131 = vld [vmem:[%s1] sm:$0x1]
      %v132 = vrot.slane %v130, 4
      %v133 = vadd.f32 %v130, %v132
      %v134 = vrot.slane %v133, 2
      %v135 = vadd.f32 %v133, %v134
      %v136 = vrot.slane %v135, 1
      %v137 = vadd.f32 %v135, %v136
      %v138 = vadd.f32 %v131, %v137
      %139 = vst [vmem:[%s1] sm:$0x1] %v138
      %v140 = vld [vmem:[%s2] sm:$0x1]
      %v141 = vmul.f32 %v130, %v130
      %v142 = vrot.slane %v141, 4
      %v143 = vadd.f32 %v141, %v142
      %v144 = vrot.slane %v143, 2
      %v145 = vadd.f32 %v143, %v144
      %v146 = vrot.slane %v145, 1
      %v147 = vadd.f32 %v145, %v146
      %v148 = vadd.f32 %v140, %v147
      %149 = vst [vmem:[%s2] sm:$0x1] %v148
      // Predicated region
      $region29: #{policy_forward.2} parent=23 // pred_check
        %p150 = pneg %p53
      $region30: #{policy_forward.2} parent=23 // pred_check_branch
        %152 = sbr.rel (%p150) target = $region32
      $region31: #{policy_forward.2} parent=23 // pred_region
        _
      $region32: #{policy_forward.2} parent=23 // pred_fallthru
        _
      // Predicated region
      $region33: #{policy_forward.2} parent=23 // pred_check
        %p153 = pneg %p74
      $region34: #{policy_forward.2} parent=23 // pred_check_branch
        %155 = sbr.rel (%p153) target = $region36
      $region35: #{policy_forward.2} parent=23 // pred_region
        _
      $region36: #{policy_forward.2} parent=23 // pred_fallthru
        _
      // Predicated region
      $region37: #{policy_forward.2} parent=23 // pred_check
        %p156 = pneg %p53
      $region38: #{policy_forward.2} parent=23 // pred_check_branch
        %158 = sbr.rel (%p156) target = $region40
      $region39: #{policy_forward.2} parent=23 // pred_region
        _
      $region40: #{policy_forward.2} parent=23 // pred_fallthru
        _
      // Predicated region
      $region41: #{policy_forward.2} parent=23 // pred_check
        %p159 = pneg %p74
      $region42: #{policy_forward.2} parent=23 // pred_check_branch
        %161 = sbr.rel (%p159) target = $region44
      $region43: #{policy_forward.2} parent=23 // pred_region
        _
      $region44: #{policy_forward.2} parent=23 // pred_fallthru
        _
    $region24: #{policy_forward.2} parent=5 // pred_fallthru
      _
    %p162 = scmp.le.s32.totalorder 2, %s9
    // Predicated region
    $region45: #{policy_forward.2} parent=5 // pred_check
      %p163 = pneg %p162
    $region46: #{policy_forward.2} parent=5 // pred_check_branch
      %165 = sbr.rel (%p163) target = $region48
    $region47: #{policy_forward.2} parent=5 // pred_region
      %s166 = ssub.s32 %s9, 2
    $region48: #{policy_forward.2} parent=5 // pred_fallthru
      _
  $region6: #{policy_forward.2} parent=0 // loop_footer
    %s13 = sadd.s32 1, %s9
  $region7: #{policy_forward.2} parent=0 // loop_footer_branch
    %8 = sbr.rel target = $region3
  $region8: #{policy_forward.2} parent=0 // loop_exit
    _

// kernel: policy_forward.3
$region0: #{policy_forward.3}
  #allocation0 [shape = 'u32[]', space=smem, size = 0x4, offset = 0x4, fixed_abs, tag = 'smem constant byte address 0x4 - core index']
  #allocation1 [shape = 'u32[72,128]{1,0:T(1,128)}', space=vmem, size = 0x9000, scoped, tag = 'internal scratch']
  %s0 = inlined_call_operand.vmem [shape: f32[16,128], index: 0, kind: input, shape index: {}]
  %s1 = inlined_call_operand.vmem [shape: f32[128,128], index: 1, kind: input, shape index: {}]
  %s2 = inlined_call_operand.vmem [shape: f32[1,128], index: 2, kind: input, shape index: {}]
  %s3 = inlined_call_operand.vmem [shape: f32[128,128], index: 3, kind: input, shape index: {}]
  %s4 = inlined_call_operand.vmem [shape: f32[1,128], index: 4, kind: input, shape index: {}]
  %s5 = inlined_call_operand.vmem [shape: f32[128,128], index: 5, kind: input, shape index: {}]
  %s6 = inlined_call_operand.vmem [shape: f32[1,128], index: 6, kind: input, shape index: {}]
  %s7 = inlined_call_operand.hbm [shape: f32[16,128], index: 7, kind: output, shape index: {}]
  %s8 = sld [smem:[#allocation0]]
  $region61: #{policy_forward.3} parent=0
    _
  %s10 = ssub.s32 1, %s8
  %s11 = scalar_select 0, %s10, %s8
  $region1: #{policy_forward.3} parent=0
    #allocation2 [shape = 'u8[8192]{0}', space=vmem, size = 0x2000, scoped, tag = 'output window, operand 0']
    #allocation3 [shape = 's32[2]{0}', space=sflag, size = 0x8, scoped, tag = 'scoped memory for policy_forward.3']
    %12 = vsyncpa [#allocation3], 0
    %s13 = scalar_lea.sflag [#allocation3], 1
    %14 = vsyncpa %s13, 0
    loop: start=0, step=1, limit=4
    $region2: #{policy_forward.3} parent=1 // loop_pre_header
      _
    $region3: #{policy_forward.3} parent=1 // loop_header
      %s16 = sphi 0, %s20
      %p17 = scmp.ge.s32.totalorder %s16, 4
      %s26 = sphi 0, %s28
      %s29 = sphi 0, %s26
      %s30 = sphi 0, %s29
      %s46 = sphi 0, %s30
      %s50 = sphi 0, %s50
      %s52 = sphi 0, %s50
      %s53 = sphi 0, %s52
      %s67 = sphi 0, %s53
      %s71 = sphi 0, %s71
      %s73 = sphi 0, %s71
      %s74 = sphi 0, %s73
      %s88 = sphi 0, %s74
      %s92 = sphi 0, %s92
      %s94 = sphi 0, %s92
      %s95 = sphi 0, %s94
      %s109 = sphi 0, %s95
      %s113 = sphi 0, %s113
      %s115 = sphi 0, %s113
      %s116 = sphi 0, %s115
      %s130 = sphi 0, %s116
      %s134 = sphi 0, %s134
      %s136 = sphi 0, %s134
      %s137 = sphi 0, %s136
      %s151 = sphi 0, %s137
      %s155 = sphi 0, %s155
      %s157 = sphi 0, %s155
      %s158 = sphi 0, %s157
      %s172 = sphi 0, %s158
      %s178 = sphi 0, %s180
      %s181 = sphi 0, %s178
      %s182 = sphi 0, %s181
      %s198 = sphi 0, %s182
    $region4: #{policy_forward.3} parent=1 // loop_header_branch
      %19 = sbr.rel (%p17) target = $region8
    $region5: #{policy_forward.3} parent=1 // loop_body
      %s21 = ssub.s32 %s16, 1
      %s22 = ssub.s32 %s16, 2
      %s23 = sadd.s32 %s16, 1
      %s24 = ssub.s32 %s16, %s23
      %p25 = scmp.eq.s32.totalorder %s24, 0
      %s27 = sadd.s32 %s26, 1
      %s28 = scalar_select %p25, %s26, %s27
      %p31 = pneg %p25
      %p32 = scmp.eq.s32.totalorder %s16, 1
      %p33 = por %p31, %p32
      %p34 = scmp.ne.s32.totalorder %s26, %s29
      %p35 = scmp.eq.s32.totalorder %s16, 0
      %p36 = por %p34, %p35
      %p37 = scmp.ne.s32.totalorder %s26, %s29
      %p38 = scmp.eq.s32.totalorder %s21, 1
      %p39 = por %p37, %p38
      %p40 = scmp.ne.s32.totalorder %s29, %s30
      %p41 = scmp.eq.s32.totalorder %s21, 0
      %p42 = por %p40, %p41
      %p43 = scmp.ne.s32.totalorder %s29, %s30
      %p44 = scmp.eq.s32.totalorder %s22, 1
      %p45 = por %p43, %p44
      %p47 = scmp.ne.s32.totalorder %s30, %s46
      %p48 = scmp.eq.s32.totalorder %s22, 0
      %p49 = por %p47, %p48
      %s51 = sadd.s32 %s50, 1
      %p54 = scmp.eq.s32.totalorder %s16, 1
      %p55 = scmp.ne.s32.totalorder %s50, %s52
      %p56 = scmp.eq.s32.totalorder %s16, 0
      %p57 = por %p55, %p56
      %p58 = scmp.ne.s32.totalorder %s50, %s52
      %p59 = scmp.eq.s32.totalorder %s21, 1
      %p60 = por %p58, %p59
      %p61 = scmp.ne.s32.totalorder %s52, %s53
      %p62 = scmp.eq.s32.totalorder %s21, 0
      %p63 = por %p61, %p62
      %p64 = scmp.ne.s32.totalorder %s52, %s53
      %p65 = scmp.eq.s32.totalorder %s22, 1
      %p66 = por %p64, %p65
      %p68 = scmp.ne.s32.totalorder %s53, %s67
      %p69 = scmp.eq.s32.totalorder %s22, 0
      %p70 = por %p68, %p69
      %s72 = sadd.s32 %s71, 1
      %p75 = scmp.eq.s32.totalorder %s16, 1
      %p76 = scmp.ne.s32.totalorder %s71, %s73
      %p77 = scmp.eq.s32.totalorder %s16, 0
      %p78 = por %p76, %p77
      %p79 = scmp.ne.s32.totalorder %s71, %s73
      %p80 = scmp.eq.s32.totalorder %s21, 1
      %p81 = por %p79, %p80
      %p82 = scmp.ne.s32.totalorder %s73, %s74
      %p83 = scmp.eq.s32.totalorder %s21, 0
      %p84 = por %p82, %p83
      %p85 = scmp.ne.s32.totalorder %s73, %s74
      %p86 = scmp.eq.s32.totalorder %s22, 1
      %p87 = por %p85, %p86
      %p89 = scmp.ne.s32.totalorder %s74, %s88
      %p90 = scmp.eq.s32.totalorder %s22, 0
      %p91 = por %p89, %p90
      %s93 = sadd.s32 %s92, 1
      %p96 = scmp.eq.s32.totalorder %s16, 1
      %p97 = scmp.ne.s32.totalorder %s92, %s94
      %p98 = scmp.eq.s32.totalorder %s16, 0
      %p99 = por %p97, %p98
      %p100 = scmp.ne.s32.totalorder %s92, %s94
      %p101 = scmp.eq.s32.totalorder %s21, 1
      %p102 = por %p100, %p101
      %p103 = scmp.ne.s32.totalorder %s94, %s95
      %p104 = scmp.eq.s32.totalorder %s21, 0
      %p105 = por %p103, %p104
      %p106 = scmp.ne.s32.totalorder %s94, %s95
      %p107 = scmp.eq.s32.totalorder %s22, 1
      %p108 = por %p106, %p107
      %p110 = scmp.ne.s32.totalorder %s95, %s109
      %p111 = scmp.eq.s32.totalorder %s22, 0
      %p112 = por %p110, %p111
      %s114 = sadd.s32 %s113, 1
      %p117 = scmp.eq.s32.totalorder %s16, 1
      %p118 = scmp.ne.s32.totalorder %s113, %s115
      %p119 = scmp.eq.s32.totalorder %s16, 0
      %p120 = por %p118, %p119
      %p121 = scmp.ne.s32.totalorder %s113, %s115
      %p122 = scmp.eq.s32.totalorder %s21, 1
      %p123 = por %p121, %p122
      %p124 = scmp.ne.s32.totalorder %s115, %s116
      %p125 = scmp.eq.s32.totalorder %s21, 0
      %p126 = por %p124, %p125
      %p127 = scmp.ne.s32.totalorder %s115, %s116
      %p128 = scmp.eq.s32.totalorder %s22, 1
      %p129 = por %p127, %p128
      %p131 = scmp.ne.s32.totalorder %s116, %s130
      %p132 = scmp.eq.s32.totalorder %s22, 0
      %p133 = por %p131, %p132
      %s135 = sadd.s32 %s134, 1
      %p138 = scmp.eq.s32.totalorder %s16, 1
      %p139 = scmp.ne.s32.totalorder %s134, %s136
      %p140 = scmp.eq.s32.totalorder %s16, 0
      %p141 = por %p139, %p140
      %p142 = scmp.ne.s32.totalorder %s134, %s136
      %p143 = scmp.eq.s32.totalorder %s21, 1
      %p144 = por %p142, %p143
      %p145 = scmp.ne.s32.totalorder %s136, %s137
      %p146 = scmp.eq.s32.totalorder %s21, 0
      %p147 = por %p145, %p146
      %p148 = scmp.ne.s32.totalorder %s136, %s137
      %p149 = scmp.eq.s32.totalorder %s22, 1
      %p150 = por %p148, %p149
      %p152 = scmp.ne.s32.totalorder %s137, %s151
      %p153 = scmp.eq.s32.totalorder %s22, 0
      %p154 = por %p152, %p153
      %s156 = sadd.s32 %s155, 1
      %p159 = scmp.eq.s32.totalorder %s16, 1
      %p160 = scmp.ne.s32.totalorder %s155, %s157
      %p161 = scmp.eq.s32.totalorder %s16, 0
      %p162 = por %p160, %p161
      %p163 = scmp.ne.s32.totalorder %s155, %s157
      %p164 = scmp.eq.s32.totalorder %s21, 1
      %p165 = por %p163, %p164
      %p166 = scmp.ne.s32.totalorder %s157, %s158
      %p167 = scmp.eq.s32.totalorder %s21, 0
      %p168 = por %p166, %p167
      %p169 = scmp.ne.s32.totalorder %s157, %s158
      %p170 = scmp.eq.s32.totalorder %s22, 1
      %p171 = por %p169, %p170
      %p173 = scmp.ne.s32.totalorder %s158, %s172
      %p174 = scmp.eq.s32.totalorder %s22, 0
      %p175 = por %p173, %p174
      %s176 = ssub.s32 %s16, %s23
      %p177 = scmp.eq.s32.totalorder %s176, 0
      %s179 = sadd.s32 %s178, 1
      %s180 = scalar_select %p177, %s178, %s179
      %p183 = pneg %p177
      %p184 = scmp.eq.s32.totalorder %s16, 1
      %p185 = por %p183, %p184
      %p186 = scmp.ne.s32.totalorder %s178, %s181
      %p187 = scmp.eq.s32.totalorder %s16, 0
      %p188 = por %p186, %p187
      %p189 = scmp.ne.s32.totalorder %s178, %s181
      %p190 = scmp.eq.s32.totalorder %s21, 1
      %p191 = por %p189, %p190
      %p192 = scmp.ne.s32.totalorder %s181, %s182
      %p193 = scmp.eq.s32.totalorder %s21, 0
      %p194 = por %p192, %p193
      %p195 = scmp.ne.s32.totalorder %s181, %s182
      %p196 = scmp.eq.s32.totalorder %s22, 1
      %p197 = por %p195, %p196
      %p199 = scmp.ne.s32.totalorder %s182, %s198
      %p200 = scmp.eq.s32.totalorder %s22, 0
      %p201 = por %p199, %p200
      %p202 = scmp.le.s32.totalorder 1, %s16
      %p203 = scmp.lt.s32.totalorder %s16, 3
      %p204 = pnand %p202, %p203
      %p205 = pneg %p204
      // Predicated region
      $region9: #{policy_forward.3} parent=5 // pred_check
        _
      $region10: #{policy_forward.3} parent=5 // pred_check_branch
        %207 = sbr.rel (%p204) target = $region12
      $region11: #{policy_forward.3} parent=5 // pred_region
        %s208 = ssub.s32 %s16, 1
        // Predicated region
        $region13: #{policy_forward.3} parent=11 // pred_check
          %p209 = pneg %p63
        $region14: #{policy_forward.3} parent=11 // pred_check_branch
          %211 = sbr.rel (%p209) target = $region16
        $region15: #{policy_forward.3} parent=11 // pred_region
          _
        $region16: #{policy_forward.3} parent=11 // pred_fallthru
          _
        // Predicated region
        $region17: #{policy_forward.3} parent=11 // pred_check
          %p212 = pneg %p84
        $region18: #{policy_forward.3} parent=11 // pred_check_branch
          %214 = sbr.rel (%p212) target = $region20
        $region19: #{policy_forward.3} parent=11 // pred_region
          _
        $region20: #{policy_forward.3} parent=11 // pred_fallthru
          _
        // Predicated region
        $region21: #{policy_forward.3} parent=11 // pred_check
          %p215 = pneg %p105
        $region22: #{policy_forward.3} parent=11 // pred_check_branch
          %217 = sbr.rel (%p215) target = $region24
        $region23: #{policy_forward.3} parent=11 // pred_region
          _
        $region24: #{policy_forward.3} parent=11 // pred_fallthru
          _
        // Predicated region
        $region25: #{policy_forward.3} parent=11 // pred_check
          %p218 = pneg %p126
        $region26: #{policy_forward.3} parent=11 // pred_check_branch
          %220 = sbr.rel (%p218) target = $region28
        $region27: #{policy_forward.3} parent=11 // pred_region
          _
        $region28: #{policy_forward.3} parent=11 // pred_fallthru
          _
        // Predicated region
        $region29: #{policy_forward.3} parent=11 // pred_check
          %p221 = pneg %p147
        $region30: #{policy_forward.3} parent=11 // pred_check_branch
          %223 = sbr.rel (%p221) target = $region32
        $region31: #{policy_forward.3} parent=11 // pred_region
          _
        $region32: #{policy_forward.3} parent=11 // pred_fallthru
          _
        // Predicated region
        $region33: #{policy_forward.3} parent=11 // pred_check
          %p224 = pneg %p168
        $region34: #{policy_forward.3} parent=11 // pred_check_branch
          %226 = sbr.rel (%p224) target = $region36
        $region35: #{policy_forward.3} parent=11 // pred_region
          _
        $region36: #{policy_forward.3} parent=11 // pred_fallthru
          _
      $region12: #{policy_forward.3} parent=5 // pred_fallthru
        _
      %p227 = scmp.lt.s32.totalorder %s16, 2
      // Predicated region
      $region37: #{policy_forward.3} parent=5 // pred_check
        %p228 = pneg %p227
      $region38: #{policy_forward.3} parent=5 // pred_check_branch
        %230 = sbr.rel (%p228) target = $region40
      $region39: #{policy_forward.3} parent=5 // pred_region
        // Predicated region
        $region41: #{policy_forward.3} parent=39 // pred_check
          %p231 = pneg %p36
        $region42: #{policy_forward.3} parent=39 // pred_check_branch
          %233 = sbr.rel (%p231) target = $region44
        $region43: #{policy_forward.3} parent=39 // pred_region
          %p234 = scmp.lt.s32.totalorder %s16, 1
          %s235 = scalar_select %p234, %s16, 1
          %s236 = smul.addr %s235, 8
          %s237 = scalar_lea.vmem %s0, %s236
        $region44: #{policy_forward.3} parent=39 // pred_fallthru
          _
      $region40: #{policy_forward.3} parent=5 // pred_fallthru
        _
      %p238 = scmp.le.s32.totalorder 1, %s16
      %p239 = scmp.lt.s32.totalorder %s16, 3
      %p240 = pnand %p238, %p239
      %p241 = pneg %p240
      // Predicated region
      $region45: #{policy_forward.3} parent=5 // pred_check
        _
      $region46: #{policy_forward.3} parent=5 // pred_check_branch
        %243 = sbr.rel (%p240) target = $region48
      $region47: #{policy_forward.3} parent=5 // pred_region
        %s244 = ssub.s32 %s16, 1
        %p245 = scmp.lt.s32.totalorder %s21, 1
        %s246 = scalar_select %p245, %s21, 1
        %s247 = smul.addr %s246, 8
        %s248 = scalar_lea.vmem %s0, %s247
        %p249 = pneg %p42
        %p250 = pneg %p39
        %p251 = pneg %p63
        %p252 = pneg %p60
        %p253 = pneg %p84
        %p254 = pneg %p81
        %p255 = pneg %p105
        %p256 = pneg %p102
        %p257 = pneg %p126
        %p258 = pneg %p123
        %p259 = pneg %p147
        %p260 = pneg %p144
        %p261 = pneg %p168
        %p262 = pneg %p165
        %p263 = pneg %p194
        %p264 = pneg %p191
        %s265 = sand.u32 %s181, 1
        %s266 = scalar_lea.sflag [#allocation3], %s265
        %s267 = sand.u32 %s181, 1
        %s268 = smul.addr %s267, 8
        %s269 = scalar_lea.vmem [#allocation2], %s268
        %p270 = scmp.lt.s32.totalorder %s21, 1
        %s271 = scalar_select %p270, %s21, 1
        %s272 = smul.addr %s271, 8
        %s273 = scalar_lea.vmem %s0, %s272
        %v274 = vld [vmem:[%s273] sm:$0xff]
        %v275 = vld [vmem:[%s1] sm:$0xff]
        %v276 = vld [vmem:[%s1 + $0x8] sm:$0xff]
        %v277 = vld [vmem:[%s1 + $0x10] sm:$0xff]
        %v278 = vld [vmem:[%s1 + $0x18] sm:$0xff]
        %v279 = vld [vmem:[%s1 + $0x20] sm:$0xff]
        %v280 = vld [vmem:[%s1 + $0x28] sm:$0xff]
        %v281 = vld [vmem:[%s1 + $0x30] sm:$0xff]
        %v282 = vld [vmem:[%s1 + $0x38] sm:$0xff]
        %v283 = vld [vmem:[%s1 + $0x40] sm:$0xff]
        %v284 = vld [vmem:[%s1 + $0x48] sm:$0xff]
        %v285 = vld [vmem:[%s1 + $0x50] sm:$0xff]
        %v286 = vld [vmem:[%s1 + $0x58] sm:$0xff]
        %v287 = vld [vmem:[%s1 + $0x60] sm:$0xff]
        %v288 = vld [vmem:[%s1 + $0x68] sm:$0xff]
        %v289 = vld [vmem:[%s1 + $0x70] sm:$0xff]
        %v290 = vld [vmem:[%s1 + $0x78] sm:$0xff]
        %v291 = vld [vmem:[%s2] sm:$0x1]
        %v293 = vperm.slane %v291, 0
        %295 = vmatpush.msra.mxu0 %v290
        %296 = vmatpush.msra.mxu0 %v289
        %297 = vmatpush.msra.mxu0 %v288
        %298 = vmatpush.msra.mxu0 %v287
        %299 = vmatpush.msra.mxu0 %v286
        %300 = vmatpush.msra.mxu0 %v285
        %301 = vmatpush.msra.mxu0 %v284
        %302 = vmatpush.msra.mxu0 %v283
        %303 = vmatpush.msra.mxu0 %v282
        %304 = vmatpush.msra.mxu0 %v281
        %305 = vmatpush.msra.mxu0 %v280
        %306 = vmatpush.msra.mxu0 %v279
        %307 = vmatpush.msra.mxu0 %v278
        %308 = vmatpush.msra.mxu0 %v277
        %309 = vmatpush.msra.mxu0 %v276
        %310 = vmatpush.msra.mxu0 %v275
        %311 = vmatmul.f32.gmra.mxu0 %v274
        %v312 = vpop.f32.mrf.mxu0
        %v313 = vadd.f32 %v293, %v312
        %314 = vdwg.mxu0
        %v315 = vmax.f32 %v313, 0.0
        %v316 = vld [vmem:[%s3] sm:$0xff]
        %v317 = vld [vmem:[%s3 + $0x8] sm:$0xff]
        %v318 = vld [vmem:[%s3 + $0x10] sm:$0xff]
        %v319 = vld [vmem:[%s3 + $0x18] sm:$0xff]
        %v320 = vld [vmem:[%s3 + $0x20] sm:$0xff]
        %v321 = vld [vmem:[%s3 + $0x28] sm:$0xff]
        %v322 = vld [vmem:[%s3 + $0x30] sm:$0xff]
        %v323 = vld [vmem:[%s3 + $0x38] sm:$0xff]
        %v324 = vld [vmem:[%s3 + $0x40] sm:$0xff]
        %v325 = vld [vmem:[%s3 + $0x48] sm:$0xff]
        %v326 = vld [vmem:[%s3 + $0x50] sm:$0xff]
        %v327 = vld [vmem:[%s3 + $0x58] sm:$0xff]
        %v328 = vld [vmem:[%s3 + $0x60] sm:$0xff]
        %v329 = vld [vmem:[%s3 + $0x68] sm:$0xff]
        %v330 = vld [vmem:[%s3 + $0x70] sm:$0xff]
        %v331 = vld [vmem:[%s3 + $0x78] sm:$0xff]
        %v332 = vld [vmem:[%s4] sm:$0x1]
        %v334 = vperm.slane %v332, 0
        %336 = vmatpush.msra.mxu0 %v331
        %337 = vmatpush.msra.mxu0 %v330
        %338 = vmatpush.msra.mxu0 %v329
        %339 = vmatpush.msra.mxu0 %v328
        %340 = vmatpush.msra.mxu0 %v327
        %341 = vmatpush.msra.mxu0 %v326
        %342 = vmatpush.msra.mxu0 %v325
        %343 = vmatpush.msra.mxu0 %v324
        %344 = vmatpush.msra.mxu0 %v323
        %345 = vmatpush.msra.mxu0 %v322
        %346 = vmatpush.msra.mxu0 %v321
        %347 = vmatpush.msra.mxu0 %v320
        %348 = vmatpush.msra.mxu0 %v319
        %349 = vmatpush.msra.mxu0 %v318
        %350 = vmatpush.msra.mxu0 %v317
        %351 = vmatpush.msra.mxu0 %v316
        %352 = vmatmul.f32.gmra.mxu0 %v315
        %v353 = vpop.f32.mrf.mxu0
        %v354 = vadd.f32 %v334, %v353
        %355 = vdwg.mxu0
        %v356 = vmax.f32 %v354, 0.0
        %v357 = vld [vmem:[%s5] sm:$0xff]
        %v358 = vld [vmem:[%s5 + $0x8] sm:$0xff]
        %v359 = vld [vmem:[%s5 + $0x10] sm:$0xff]
        %v360 = vld [vmem:[%s5 + $0x18] sm:$0xff]
        %v361 = vld [vmem:[%s5 + $0x20] sm:$0xff]
        %v362 = vld [vmem:[%s5 + $0x28] sm:$0xff]
        %v363 = vld [vmem:[%s5 + $0x30] sm:$0xff]
        %v364 = vld [vmem:[%s5 + $0x38] sm:$0xff]
        %v365 = vld [vmem:[%s5 + $0x40] sm:$0xff]
        %v366 = vld [vmem:[%s5 + $0x48] sm:$0xff]
        %v367 = vld [vmem:[%s5 + $0x50] sm:$0xff]
        %v368 = vld [vmem:[%s5 + $0x58] sm:$0xff]
        %v369 = vld [vmem:[%s5 + $0x60] sm:$0xff]
        %v370 = vld [vmem:[%s5 + $0x68] sm:$0xff]
        %v371 = vld [vmem:[%s5 + $0x70] sm:$0xff]
        %v372 = vld [vmem:[%s5 + $0x78] sm:$0xff]
        %v373 = vld [vmem:[%s6] sm:$0x1]
        %v375 = vperm.slane %v373, 0
        %377 = vmatpush.msra.mxu0 %v372
        %378 = vmatpush.msra.mxu0 %v371
        %379 = vmatpush.msra.mxu0 %v370
        %380 = vmatpush.msra.mxu0 %v369
        %381 = vmatpush.msra.mxu0 %v368
        %382 = vmatpush.msra.mxu0 %v367
        %383 = vmatpush.msra.mxu0 %v366
        %384 = vmatpush.msra.mxu0 %v365
        %385 = vmatpush.msra.mxu0 %v364
        %386 = vmatpush.msra.mxu0 %v363
        %387 = vmatpush.msra.mxu0 %v362
        %388 = vmatpush.msra.mxu0 %v361
        %389 = vmatpush.msra.mxu0 %v360
        %390 = vmatpush.msra.mxu0 %v359
        %391 = vmatpush.msra.mxu0 %v358
        %392 = vmatpush.msra.mxu0 %v357
        %393 = vmatmul.f32.gmra.mxu0 %v356
        %v394 = vpop.f32.mrf.mxu0
        %v395 = vadd.f32 %v375, %v394
        %396 = vdwg.mxu0
        %397 = vst [vmem:[%s269] sm:$0xff] %v395
        %s398 = sand.u32 %s181, 1
        %s399 = scalar_lea.sflag [#allocation3], %s398
        %s400 = sand.u32 %s181, 1
        %s401 = smul.addr %s400, 8
        %s402 = scalar_lea.vmem [#allocation2], %s401
        // Predicated region
        $region49: #{policy_forward.3} parent=47 // pred_check
          %p403 = pneg %p191
        $region50: #{policy_forward.3} parent=47 // pred_check_branch
          %405 = sbr.rel (%p403) target = $region52
        $region51: #{policy_forward.3} parent=47 // pred_region
          %407 = vsyncadd %s399, 0
          %s408 = smul.addr %s21, 8
          %s409 = scalar_lea.hbm %s7, %s408
          %s411 = sshll.u32 %s402, 4
          %s412 = int_to_ptr.vmem [resolvable:$true] %s411
          %s413 = sshll.u32 %s409, 4
          %s414 = int_to_ptr.hbm [resolvable:$true] %s413
          %416 = dma.vmem_to_hbm [thread:$0]  %s412, 128, %s414, %s399
        $region52: #{policy_forward.3} parent=47 // pred_fallthru
          _
      $region48: #{policy_forward.3} parent=5 // pred_fallthru
        _
      %p417 = scmp.le.s32.totalorder 2, %s16
      // Predicated region
      $region53: #{policy_forward.3} parent=5 // pred_check
        %p418 = pneg %p417
      $region54: #{policy_forward.3} parent=5 // pred_check_branch
        %420 = sbr.rel (%p418) target = $region56
      $region55: #{policy_forward.3} parent=5 // pred_region
        %s421 = ssub.s32 %s16, 2
        // Predicated region
        $region57: #{policy_forward.3} parent=55 // pred_check
          %p422 = pneg %p197
        $region58: #{policy_forward.3} parent=55 // pred_check_branch
          %424 = sbr.rel (%p422) target = $region60
        $region59: #{policy_forward.3} parent=55 // pred_region
          %s425 = sand.u32 %s182, 1
          %s426 = scalar_lea.sflag [#allocation3], %s425
          %s427 = sand.u32 %s182, 1
          %s428 = smul.addr %s427, 8
          %s429 = scalar_lea.vmem [#allocation2], %s428
          %431 = dma.done %s426, 128
        $region60: #{policy_forward.3} parent=55 // pred_fallthru
          _
      $region56: #{policy_forward.3} parent=5 // pred_fallthru
        _
    $region6: #{policy_forward.3} parent=1 // loop_footer
      %s20 = sadd.s32 1, %s16
    $region7: #{policy_forward.3} parent=1 // loop_footer_branch
      %15 = sbr.rel target = $region3
    $region8: #{policy_forward.3} parent=1 // loop_exit
      _
    %432 = vsyncpa [#allocation3], 1
    %s433 = scalar_lea.sflag [#allocation3], 1
    %434 = vsyncpa %s433, 1

</llo_original>
